<compile_context>
chip_gen: v5e
topology: v5e:2x2
jax: 0.10.0
libtpu: 0.0.40
codegen_flags: <defaults>
</compile_context>

<pallas_src>
import jax
import jax.numpy as jnp
import numpy as np
from jax.experimental import pallas as pl
from jax.experimental.pallas import tpu as pltpu

N_CHAINS = 3                       # AugMix always mixes 3 augmentation chains
PARAMS_PER_VIEW = 1 + 4 * N_CHAINS  # m, w[3], thr[3], lvl[3], inv_lvl[3]
LANES = 128


def _make_kernel(n_views):
    """Kernel over one (rows_tile, 128) tile of one view of one image."""

    def kernel(p_ref,                    # scalar-prefetch: flat f32 params in SMEM
               x_ref, mean_ref, istd_ref,  # VMEM inputs
               out_ref):                   # VMEM output tile
        b = pl.program_id(0)
        v = pl.program_id(2)
        base = (b * n_views + v) * PARAMS_PER_VIEW

        xo = x_ref[...]          # (rows_tile, 128) raw pixels in [0, 1]
        mean = mean_ref[...]     # (rows_tile, 1) per-row channel mean
        istd = istd_ref[...]     # (rows_tile, 1) per-row channel 1/std

        m = p_ref[base]
        om = 1.0 - m
        xo_inv = 1.0 - xo        # hoisted: shared by all 3 chains (solarize invert)

        # Accumulate the convex combination on the raw [0,1] scale and apply the
        # affine Normalize exactly once at the end:
        #   out = (m*xo + sum_i (1-m)*w_i*xa_i - wsum*mean) * istd
        #   with wsum = m + (1-m)*sum_i w_i  (== 1 analytically; kept explicit).
        acc = m * xo
        wsum = m
        for i in range(N_CHAINS):
            wi = om * p_ref[base + 1 + i]
            thr = p_ref[base + 1 + N_CHAINS + i]
            lv = p_ref[base + 1 + 2 * N_CHAINS + i]
            ilv = p_ref[base + 1 + 3 * N_CHAINS + i]
            # solarize analogue on [0,1]: invert pixels above threshold
            xa = jnp.where(xo >= thr, xo_inv, xo)
            # posterize analogue: quantize to `lv` levels (mul by precomputed recip)
            xa = jnp.floor(xa * lv) * ilv
            acc = acc + wi * xa
            wsum = wsum + wi

        out_ref[...] = (acc - wsum * mean) * istd

    return kernel


def _pick_rows_tile(rp, max_rows=2048):
    """Largest multiple-of-8 divisor of `rp` (rp % 8 == 0) that is <= max_rows,
    preferring a split into >= 2 tiles so both v7x TensorCores get work."""
    limit = min(max_rows, rp)
    if rp >= 16:
        limit = min(limit, rp // 2)
        limit -= limit % 8
        limit = max(limit, 8)
    best = 8
    for t in range(8, limit + 1, 8):
        if rp % t == 0:
            best = t
    return best


def _pack_params(w, m, thr, lvl):
    """Pack (m, w, thr, lvl, 1/lvl) into one flat f32 array for SMEM prefetch."""
    inv_lvl = 1.0 / lvl
    p = jnp.concatenate(
        [m[..., None], w, thr, lvl, inv_lvl], axis=-1)   # (B, V, PARAMS_PER_VIEW)
    return p.reshape(-1).astype(jnp.float32)


def augmix_forward_batched(imgs, mean, std, w, m, thr, lvl, *, max_tile_rows=2048):
    """imgs: (B, C, H, W) f32 in [0,1]; w/thr/lvl: (B, V, 3); m: (B, V).
    Returns (B, V, C, H, W) f32 normalized AugMix views."""
    B, C, H, W = imgs.shape
    V = w.shape[1]
    HW = H * W

    # Lane-dense, sublane-dense layout: (B, C, HW) -> (B, rows, 128) with each row
    # staying inside one channel; pad lanes to 128 and rows to a multiple of 8.
    HWp = pl.cdiv(HW, LANES) * LANES
    rpc = HWp // LANES              # rows per channel
    R = C * rpc
    Rp = pl.cdiv(R, 8) * 8

    x2d = imgs.reshape(B, C, HW).astype(jnp.float32)
    if HWp != HW:
        x2d = jnp.pad(x2d, ((0, 0), (0, 0), (0, HWp - HW)))
    x2d = x2d.reshape(B, R, LANES)
    if Rp != R:
        x2d = jnp.pad(x2d, ((0, 0), (0, Rp - R), (0, 0)))

    # Per-row channel stats (tiny (Rp, 1) vectors instead of full broadcasts).
    mean_rows = jnp.repeat(mean.astype(jnp.float32), rpc).reshape(R, 1)
    istd_rows = jnp.repeat((1.0 / std).astype(jnp.float32), rpc).reshape(R, 1)
    if Rp != R:
        mean_rows = jnp.pad(mean_rows, ((0, Rp - R), (0, 0)))
        istd_rows = jnp.pad(istd_rows, ((0, Rp - R), (0, 0)), constant_values=1.0)

    params = _pack_params(w, m, thr, lvl)

    rows_tile = _pick_rows_tile(Rp, max_tile_rows)
    n_tiles = Rp // rows_tile

    grid_spec = pltpu.PrefetchScalarGridSpec(
        num_scalar_prefetch=1,               # packed params -> SMEM
        grid=(B, n_tiles, V),                # views innermost -> image DMA'd once/tile
        in_specs=[
            pl.BlockSpec((None, rows_tile, LANES), lambda b, t, v, p: (b, t, 0)),
            pl.BlockSpec((rows_tile, 1), lambda b, t, v, p: (t, 0)),
            pl.BlockSpec((rows_tile, 1), lambda b, t, v, p: (t, 0)),
        ],
        out_specs=pl.BlockSpec((None, None, rows_tile, LANES),
                               lambda b, t, v, p: (b, v, t, 0)),
    )

    out = pl.pallas_call(
        _make_kernel(V),
        out_shape=jax.ShapeDtypeStruct((B, V, Rp, LANES), jnp.float32),
        grid_spec=grid_spec,
        compiler_params=pltpu.CompilerParams(
            dimension_semantics=("parallel", "parallel", "arbitrary")),
    )(params, x2d, mean_rows, istd_rows)

    # Undo padding + restore (B, V, C, H, W).
    out = out[:, :, :R, :].reshape(B, V, C, HWp)[..., :HW].reshape(B, V, C, H, W)
    return out


def augmix_forward(img, mean, std, w, m, thr, lvl):
    """Single image (C,H,W) -> (n_views, C, H, W), matching AugMix.forward."""
    return augmix_forward_batched(img[None], mean, std,
                                  w[None], m[None], thr[None], lvl[None])[0]


def _reference(imgs, mean, std, w, m, thr, lvl):
    """Pure-JAX reference of the same math (mirrors AugMix.augmix per image/view)."""
    mean3 = mean.reshape(-1, 1, 1)
    istd3 = 1.0 / std.reshape(-1, 1, 1)
    B, V = w.shape[:2]
    outs = []
    for b in range(B):
        x = imgs[b]
        x_proc = (x - mean3) * istd3
        views = []
        for v in range(V):
            mix = jnp.zeros_like(x_proc)
            for i in range(N_CHAINS):
                xa = jnp.where(x >= thr[b, v, i], 1.0 - x, x)
                xa = jnp.floor(xa * lvl[b, v, i]) / lvl[b, v, i]
                mix = mix + w[b, v, i] * ((xa - mean3) * istd3)
            views.append(m[b, v] * x_proc + (1.0 - m[b, v]) * mix)
        outs.append(jnp.stack(views))
    return jnp.stack(outs)


if __name__ == "__main__":
    B, n_views, C, H, W = 2, 2, 3, 16, 16

    key = jax.random.PRNGKey(0)
    k_img, k_w, k_m, k_thr, k_lvl = jax.random.split(key, 5)

    # "imgs": stand-in for ToTensor(preaugment(PIL image)) -> CHW float in [0,1]
    imgs = jax.random.uniform(k_img, (B, C, H, W), dtype=jnp.float32)

    # AugMix randomness, sampled deterministically per image/view:
    #   w ~ Dirichlet([1,1,1]), m ~ Beta(1,1) == Uniform(0,1)
    w = jax.random.dirichlet(k_w, jnp.ones((N_CHAINS,), jnp.float32),
                             shape=(B, n_views)).astype(jnp.float32)
    m = jax.random.uniform(k_m, (B, n_views), dtype=jnp.float32)
    # per-chain augmentation parameters (solarize threshold, posterize levels)
    thr = jax.random.uniform(k_thr, (B, n_views, N_CHAINS),
                             minval=0.3, maxval=1.0, dtype=jnp.float32)
    lvl = jax.random.randint(k_lvl, (B, n_views, N_CHAINS), 2, 9).astype(jnp.float32)

    # ImageNet normalization constants from the module's docstring example.
    mean = jnp.array([0.485, 0.456, 0.406], dtype=jnp.float32)
    std = jnp.array([0.229, 0.224, 0.225], dtype=jnp.float32)

    out = augmix_forward_batched(imgs, mean, std, w, m, thr, lvl)
    out = jax.block_until_ready(out)

    ref = _reference(imgs, mean, std, w, m, thr, lvl)
    assert out.shape == (B, n_views, C, H, W), out.shape
    np.testing.assert_allclose(np.asarray(out), np.asarray(ref), rtol=1e-5, atol=1e-5)

    # Also exercise the single-image API matching AugMix.forward's output shape.
    out1 = jax.block_until_ready(
        augmix_forward(imgs[0], mean, std, w[0], m[0], thr[0], lvl[0]))
    assert out1.shape == (n_views, C, H, W), out1.shape
    np.testing.assert_allclose(np.asarray(out1), np.asarray(ref[0]),
                               rtol=1e-5, atol=1e-5)

    print("KERNEL_OK")
</pallas_src>

<mosaic_0001>
module attributes {stable_mosaic.version = 11 : i64} {
  func.func @kernel(%arg0: i32, %arg1: i32, %arg2: i32, %arg3: memref<52xf32, #tpu.memory_space<smem>>, %arg4: memref<1x8x128xf32, #tpu.memory_space<vmem>>, %arg5: memref<8x1xf32, #tpu.memory_space<vmem>>, %arg6: memref<8x1xf32, #tpu.memory_space<vmem>>, %arg7: memref<1x1x8x128xf32, #tpu.memory_space<vmem>>) attributes {dimension_semantics = [#tpu.dimension_semantics<parallel>, #tpu.dimension_semantics<parallel>, #tpu.dimension_semantics<arbitrary>], iteration_bounds = array<i64: 2, 1, 2>, scalar_prefetch = 1 : i64, scratch_operands = 0 : i64, tpu.core_type = #tpu.core_type<tc>, window_params = [{transform_indices = @transform_0, window_bounds = array<i64: 1, 8, 128>}, {transform_indices = @transform_1, window_bounds = array<i64: 8, 1>}, {transform_indices = @transform_2, window_bounds = array<i64: 8, 1>}, {transform_indices = @transform_3, window_bounds = array<i64: 1, 1, 8, 128>}]} {
    %c2_i32 = arith.constant 2 : i32
    %0 = arith.muli %arg0, %c2_i32 : i32
    %1 = arith.addi %0, %arg2 : i32
    %c13_i32 = arith.constant 13 : i32
    %2 = arith.muli %1, %c13_i32 : i32
    %c0 = arith.constant 0 : index
    %c0_0 = arith.constant 0 : index
    %c0_1 = arith.constant 0 : index
    %3 = vector.load %arg4[%c0, %c0_0, %c0_1] : memref<1x8x128xf32, #tpu.memory_space<vmem>>, vector<1x8x128xf32>
    %4 = vector.shape_cast %3 : vector<1x8x128xf32> to vector<8x128xf32>
    %c0_2 = arith.constant 0 : index
    %c0_3 = arith.constant 0 : index
    %5 = vector.load %arg5[%c0_2, %c0_3] : memref<8x1xf32, #tpu.memory_space<vmem>>, vector<8x1xf32>
    %c0_4 = arith.constant 0 : index
    %c0_5 = arith.constant 0 : index
    %6 = vector.load %arg6[%c0_4, %c0_5] : memref<8x1xf32, #tpu.memory_space<vmem>>, vector<8x1xf32>
    %7 = arith.index_cast %2 : i32 to index
    %8 = memref.load %arg3[%7] : memref<52xf32, #tpu.memory_space<smem>>
    %cst = arith.constant 1.000000e+00 : f32
    %9 = arith.subf %cst, %8 : f32
    %cst_6 = arith.constant 1.000000e+00 : f32
    %10 = vector.broadcast %cst_6 : f32 to vector<8x128xf32>
    %11 = arith.subf %10, %4 : vector<8x128xf32>
    %12 = vector.broadcast %8 : f32 to vector<8x128xf32>
    %13 = arith.mulf %12, %4 : vector<8x128xf32>
    %c1_i32 = arith.constant 1 : i32
    %14 = arith.addi %2, %c1_i32 : i32
    %c0_i32 = arith.constant 0 : i32
    %15 = arith.addi %14, %c0_i32 : i32
    %16 = arith.index_cast %15 : i32 to index
    %17 = memref.load %arg3[%16] : memref<52xf32, #tpu.memory_space<smem>>
    %18 = arith.mulf %9, %17 : f32
    %c1_i32_7 = arith.constant 1 : i32
    %19 = arith.addi %2, %c1_i32_7 : i32
    %c3_i32 = arith.constant 3 : i32
    %20 = arith.addi %19, %c3_i32 : i32
    %c0_i32_8 = arith.constant 0 : i32
    %21 = arith.addi %20, %c0_i32_8 : i32
    %22 = arith.index_cast %21 : i32 to index
    %23 = memref.load %arg3[%22] : memref<52xf32, #tpu.memory_space<smem>>
    %c1_i32_9 = arith.constant 1 : i32
    %24 = arith.addi %2, %c1_i32_9 : i32
    %c6_i32 = arith.constant 6 : i32
    %25 = arith.addi %24, %c6_i32 : i32
    %c0_i32_10 = arith.constant 0 : i32
    %26 = arith.addi %25, %c0_i32_10 : i32
    %27 = arith.index_cast %26 : i32 to index
    %28 = memref.load %arg3[%27] : memref<52xf32, #tpu.memory_space<smem>>
    %c1_i32_11 = arith.constant 1 : i32
    %29 = arith.addi %2, %c1_i32_11 : i32
    %c9_i32 = arith.constant 9 : i32
    %30 = arith.addi %29, %c9_i32 : i32
    %c0_i32_12 = arith.constant 0 : i32
    %31 = arith.addi %30, %c0_i32_12 : i32
    %32 = arith.index_cast %31 : i32 to index
    %33 = memref.load %arg3[%32] : memref<52xf32, #tpu.memory_space<smem>>
    %34 = vector.broadcast %23 : f32 to vector<8x128xf32>
    %35 = arith.cmpf oge, %4, %34 : vector<8x128xf32>
    %36 = arith.select %35, %11, %4 : vector<8x128xi1>, vector<8x128xf32>
    %37 = vector.broadcast %28 : f32 to vector<8x128xf32>
    %38 = arith.mulf %36, %37 : vector<8x128xf32>
    %39 = math.floor %38 : vector<8x128xf32>
    %40 = vector.broadcast %33 : f32 to vector<8x128xf32>
    %41 = arith.mulf %39, %40 : vector<8x128xf32>
    %42 = vector.broadcast %18 : f32 to vector<8x128xf32>
    %43 = arith.mulf %42, %41 : vector<8x128xf32>
    %44 = arith.addf %13, %43 : vector<8x128xf32>
    %45 = arith.addf %8, %18 : f32
    %c1_i32_13 = arith.constant 1 : i32
    %46 = arith.addi %2, %c1_i32_13 : i32
    %c1_i32_14 = arith.constant 1 : i32
    %47 = arith.addi %46, %c1_i32_14 : i32
    %48 = arith.index_cast %47 : i32 to index
    %49 = memref.load %arg3[%48] : memref<52xf32, #tpu.memory_space<smem>>
    %50 = arith.mulf %9, %49 : f32
    %c1_i32_15 = arith.constant 1 : i32
    %51 = arith.addi %2, %c1_i32_15 : i32
    %c3_i32_16 = arith.constant 3 : i32
    %52 = arith.addi %51, %c3_i32_16 : i32
    %c1_i32_17 = arith.constant 1 : i32
    %53 = arith.addi %52, %c1_i32_17 : i32
    %54 = arith.index_cast %53 : i32 to index
    %55 = memref.load %arg3[%54] : memref<52xf32, #tpu.memory_space<smem>>
    %c1_i32_18 = arith.constant 1 : i32
    %56 = arith.addi %2, %c1_i32_18 : i32
    %c6_i32_19 = arith.constant 6 : i32
    %57 = arith.addi %56, %c6_i32_19 : i32
    %c1_i32_20 = arith.constant 1 : i32
    %58 = arith.addi %57, %c1_i32_20 : i32
    %59 = arith.index_cast %58 : i32 to index
    %60 = memref.load %arg3[%59] : memref<52xf32, #tpu.memory_space<smem>>
    %c1_i32_21 = arith.constant 1 : i32
    %61 = arith.addi %2, %c1_i32_21 : i32
    %c9_i32_22 = arith.constant 9 : i32
    %62 = arith.addi %61, %c9_i32_22 : i32
    %c1_i32_23 = arith.constant 1 : i32
    %63 = arith.addi %62, %c1_i32_23 : i32
    %64 = arith.index_cast %63 : i32 to index
    %65 = memref.load %arg3[%64] : memref<52xf32, #tpu.memory_space<smem>>
    %66 = vector.broadcast %55 : f32 to vector<8x128xf32>
    %67 = arith.cmpf oge, %4, %66 : vector<8x128xf32>
    %68 = arith.select %67, %11, %4 : vector<8x128xi1>, vector<8x128xf32>
    %69 = vector.broadcast %60 : f32 to vector<8x128xf32>
    %70 = arith.mulf %68, %69 : vector<8x128xf32>
    %71 = math.floor %70 : vector<8x128xf32>
    %72 = vector.broadcast %65 : f32 to vector<8x128xf32>
    %73 = arith.mulf %71, %72 : vector<8x128xf32>
    %74 = vector.broadcast %50 : f32 to vector<8x128xf32>
    %75 = arith.mulf %74, %73 : vector<8x128xf32>
    %76 = arith.addf %44, %75 : vector<8x128xf32>
    %77 = arith.addf %45, %50 : f32
    %c1_i32_24 = arith.constant 1 : i32
    %78 = arith.addi %2, %c1_i32_24 : i32
    %c2_i32_25 = arith.constant 2 : i32
    %79 = arith.addi %78, %c2_i32_25 : i32
    %80 = arith.index_cast %79 : i32 to index
    %81 = memref.load %arg3[%80] : memref<52xf32, #tpu.memory_space<smem>>
    %82 = arith.mulf %9, %81 : f32
    %c1_i32_26 = arith.constant 1 : i32
    %83 = arith.addi %2, %c1_i32_26 : i32
    %c3_i32_27 = arith.constant 3 : i32
    %84 = arith.addi %83, %c3_i32_27 : i32
    %c2_i32_28 = arith.constant 2 : i32
    %85 = arith.addi %84, %c2_i32_28 : i32
    %86 = arith.index_cast %85 : i32 to index
    %87 = memref.load %arg3[%86] : memref<52xf32, #tpu.memory_space<smem>>
    %c1_i32_29 = arith.constant 1 : i32
    %88 = arith.addi %2, %c1_i32_29 : i32
    %c6_i32_30 = arith.constant 6 : i32
    %89 = arith.addi %88, %c6_i32_30 : i32
    %c2_i32_31 = arith.constant 2 : i32
    %90 = arith.addi %89, %c2_i32_31 : i32
    %91 = arith.index_cast %90 : i32 to index
    %92 = memref.load %arg3[%91] : memref<52xf32, #tpu.memory_space<smem>>
    %c1_i32_32 = arith.constant 1 : i32
    %93 = arith.addi %2, %c1_i32_32 : i32
    %c9_i32_33 = arith.constant 9 : i32
    %94 = arith.addi %93, %c9_i32_33 : i32
    %c2_i32_34 = arith.constant 2 : i32
    %95 = arith.addi %94, %c2_i32_34 : i32
    %96 = arith.index_cast %95 : i32 to index
    %97 = memref.load %arg3[%96] : memref<52xf32, #tpu.memory_space<smem>>
    %98 = vector.broadcast %87 : f32 to vector<8x128xf32>
    %99 = arith.cmpf oge, %4, %98 : vector<8x128xf32>
    %100 = arith.select %99, %11, %4 : vector<8x128xi1>, vector<8x128xf32>
    %101 = vector.broadcast %92 : f32 to vector<8x128xf32>
    %102 = arith.mulf %100, %101 : vector<8x128xf32>
    %103 = math.floor %102 : vector<8x128xf32>
    %104 = vector.broadcast %97 : f32 to vector<8x128xf32>
    %105 = arith.mulf %103, %104 : vector<8x128xf32>
    %106 = vector.broadcast %82 : f32 to vector<8x128xf32>
    %107 = arith.mulf %106, %105 : vector<8x128xf32>
    %108 = arith.addf %76, %107 : vector<8x128xf32>
    %109 = arith.addf %77, %82 : f32
    %110 = vector.broadcast %109 : f32 to vector<8x1xf32>
    %111 = arith.mulf %110, %5 : vector<8x1xf32>
    %112 = vector.broadcast %111 : vector<8x1xf32> to vector<8x128xf32>
    %113 = arith.subf %108, %112 : vector<8x128xf32>
    %114 = vector.broadcast %6 : vector<8x1xf32> to vector<8x128xf32>
    %115 = arith.mulf %113, %114 : vector<8x128xf32>
    %c0_35 = arith.constant 0 : index
    %c0_36 = arith.constant 0 : index
    %c0_37 = arith.constant 0 : index
    %c0_38 = arith.constant 0 : index
    %116 = vector.load %arg7[%c0_35, %c0_36, %c0_37, %c0_38] : memref<1x1x8x128xf32, #tpu.memory_space<vmem>>, vector<1x1x8x128xf32>
    %117 = vector.shape_cast %116 : vector<1x1x8x128xf32> to vector<8x128xf32>
    %118 = vector.shape_cast %115 : vector<8x128xf32> to vector<1x1x8x128xf32>
    tpu.vector_store %arg7[%c0_35, %c0_36, %c0_37, %c0_38], %118 {strides = array<i32>} : memref<1x1x8x128xf32, #tpu.memory_space<vmem>>, vector<1x1x8x128xf32>,
    return
  }
  func.func @transform_0(%arg0: i32, %arg1: i32, %arg2: i32, %arg3: memref<52xf32, #tpu.memory_space<smem>>) -> (i32, i32, i32) {
    %c0_i32 = arith.constant 0 : i32
    %c0_i32_0 = arith.constant 0 : i32
    return %arg0, %arg1, %c0_i32 : i32, i32, i32
  }
  func.func @transform_1(%arg0: i32, %arg1: i32, %arg2: i32, %arg3: memref<52xf32, #tpu.memory_space<smem>>) -> (i32, i32) {
    %c0_i32 = arith.constant 0 : i32
    %c0_i32_0 = arith.constant 0 : i32
    return %arg1, %c0_i32 : i32, i32
  }
  func.func @transform_2(%arg0: i32, %arg1: i32, %arg2: i32, %arg3: memref<52xf32, #tpu.memory_space<smem>>) -> (i32, i32) {
    %c0_i32 = arith.constant 0 : i32
    %c0_i32_0 = arith.constant 0 : i32
    return %arg1, %c0_i32 : i32, i32
  }
  func.func @transform_3(%arg0: i32, %arg1: i32, %arg2: i32, %arg3: memref<52xf32, #tpu.memory_space<smem>>) -> (i32, i32, i32, i32) {
    %c0_i32 = arith.constant 0 : i32
    %c0_i32_0 = arith.constant 0 : i32
    return %arg0, %arg2, %arg1, %c0_i32 : i32, i32, i32, i32
  }
}

</mosaic_0001>

<llo_original>
// kernel: tpu_custom_call.1
$region0: #{tpu_custom_call.1}
  #allocation0 [shape = 'u32[]', space=smem, size = 0x4, offset = 0x4, fixed_abs, tag = 'smem constant byte address 0x4 - core index']
  #allocation1 [shape = 'u32[72,128]{1,0:T(1,128)}', space=vmem, size = 0x9000, scoped, tag = 'internal scratch']
  #allocation2 [shape = 's32[1]{0}', space=sflag, size = 0x4, scoped, tag = 'scoped memory for tpu_custom_call.1']
  #allocation3 [shape = 'u8[512]{0}', space=smem, size = 0x200, scoped, tag = 'prefetched SMEM operand 0']
  %s0 = inlined_call_operand.vmem [shape: f32[52], index: 0, kind: input, shape index: {}]
  %s1 = inlined_call_operand.vmem [shape: f32[2,8,128], index: 1, kind: input, shape index: {}]
  %s2 = inlined_call_operand.vmem [shape: f32[8,1], index: 2, kind: input, shape index: {}]
  %s3 = inlined_call_operand.vmem [shape: f32[8,1], index: 3, kind: input, shape index: {}]
  %s4 = inlined_call_operand.hbm [shape: f32[2,2,8,128], index: 4, kind: output, shape index: {}]
  %s5 = sld [smem:[#allocation0]]
  $region45: #{tpu_custom_call.1} parent=0
    _
  %s7 = ssub.s32 1, %s5
  %s8 = scalar_select 0, %s7, %s5
  %s10 = sshll.u32 %s0, 4
  %s11 = int_to_ptr.vmem [resolvable:$true] %s10
  %13 = dma.vmem_to_smem %s11, 16, [#allocation3], [#allocation2]
  %15 = dma.done [#allocation2], 16
  %16 = sfence
  $region1: #{tpu_custom_call.1} parent=0
    #allocation4 [shape = 'u8[8192]{0}', space=vmem, size = 0x2000, scoped, tag = 'output window, operand 0']
    #allocation5 [shape = 's32[2]{0}', space=sflag, size = 0x8, scoped, tag = 'scoped memory for tpu_custom_call.1']
    %17 = vsyncpa [#allocation5], 0
    %s18 = scalar_lea.sflag [#allocation5], 1
    %19 = vsyncpa %s18, 0
    loop: start=0, step=1, limit=6
    $region2: #{tpu_custom_call.1} parent=1 // loop_pre_header
      _
    $region3: #{tpu_custom_call.1} parent=1 // loop_header
      %s21 = sphi 0, %s25
      %p22 = scmp.ge.s32.totalorder %s21, 6
      %s28 = sphi 0, %s47
      %s29 = sphi 0, %s43
      %s30 = sphi 0, %s39
      %s31 = sphi 0, %s28
      %s32 = sphi 0, %s29
      %s33 = sphi 0, %s30
      %s34 = sphi 0, %s31
      %s35 = sphi 0, %s32
      %s36 = sphi 0, %s33
      %s52 = sphi 0, %s54
      %s55 = sphi 0, %s52
      %s56 = sphi 0, %s55
      %s72 = sphi 0, %s56
      %s78 = sphi 0, %s80
      %s81 = sphi 0, %s78
      %s82 = sphi 0, %s81
      %s98 = sphi 0, %s82
      %s104 = sphi 0, %s106
      %s107 = sphi 0, %s104
      %s108 = sphi 0, %s107
      %s124 = sphi 0, %s108
      %s134 = sphi 0, %s136
      %s137 = sphi 0, %s134
      %s138 = sphi 0, %s137
      %s154 = sphi 0, %s138
    $region4: #{tpu_custom_call.1} parent=1 // loop_header_branch
      %24 = sbr.rel (%p22) target = $region8
    $region5: #{tpu_custom_call.1} parent=1 // loop_body
      %s26 = ssub.s32 %s21, 1
      %s27 = ssub.s32 %s21, 2
      %s37 = sadd.s32 1, %s30
      %p38 = scmp.ge.s32.totalorder %s37, 2
      %s39 = scalar_select %p38, 0, %s37
      %s40 = sadd.s32 1, %s29
      %s41 = scalar_select %p38, %s40, %s29
      %p42 = scmp.ge.s32.totalorder %s41, 1
      %s43 = scalar_select %p42, 0, %s41
      %s44 = sadd.s32 1, %s28
      %s45 = scalar_select %p42, %s44, %s28
      %p46 = scmp.ge.s32.totalorder %s45, 2
      %s47 = scalar_select %p46, 0, %s45
      %s48 = ssub.s32 %s28, %s47
      %s49 = ssub.s32 %s29, %s43
      %s50 = sor.u32 %s48, %s49
      %p51 = scmp.eq.s32.totalorder %s50, 0
      %s53 = sadd.s32 %s52, 1
      %s54 = scalar_select %p51, %s52, %s53
      %p57 = pneg %p51
      %p58 = scmp.eq.s32.totalorder %s21, 3
      %p59 = por %p57, %p58
      %p60 = scmp.ne.s32.totalorder %s52, %s55
      %p61 = scmp.eq.s32.totalorder %s21, 0
      %p62 = por %p60, %p61
      %p63 = scmp.ne.s32.totalorder %s52, %s55
      %p64 = scmp.eq.s32.totalorder %s26, 3
      %p65 = por %p63, %p64
      %p66 = scmp.ne.s32.totalorder %s55, %s56
      %p67 = scmp.eq.s32.totalorder %s26, 0
      %p68 = por %p66, %p67
      %p69 = scmp.ne.s32.totalorder %s55, %s56
      %p70 = scmp.eq.s32.totalorder %s27, 3
      %p71 = por %p69, %p70
      %p73 = scmp.ne.s32.totalorder %s56, %s72
      %p74 = scmp.eq.s32.totalorder %s27, 0
      %p75 = por %p73, %p74
      %s76 = ssub.s32 %s29, %s43
      %p77 = scmp.eq.s32.totalorder %s76, 0
      %s79 = sadd.s32 %s78, 1
      %s80 = scalar_select %p77, %s78, %s79
      %p83 = pneg %p77
      %p84 = scmp.eq.s32.totalorder %s21, 3
      %p85 = por %p83, %p84
      %p86 = scmp.ne.s32.totalorder %s78, %s81
      %p87 = scmp.eq.s32.totalorder %s21, 0
      %p88 = por %p86, %p87
      %p89 = scmp.ne.s32.totalorder %s78, %s81
      %p90 = scmp.eq.s32.totalorder %s26, 3
      %p91 = por %p89, %p90
      %p92 = scmp.ne.s32.totalorder %s81, %s82
      %p93 = scmp.eq.s32.totalorder %s26, 0
      %p94 = por %p92, %p93
      %p95 = scmp.ne.s32.totalorder %s81, %s82
      %p96 = scmp.eq.s32.totalorder %s27, 3
      %p97 = por %p95, %p96
      %p99 = scmp.ne.s32.totalorder %s82, %s98
      %p100 = scmp.eq.s32.totalorder %s27, 0
      %p101 = por %p99, %p100
      %s102 = ssub.s32 %s29, %s43
      %p103 = scmp.eq.s32.totalorder %s102, 0
      %s105 = sadd.s32 %s104, 1
      %s106 = scalar_select %p103, %s104, %s105
      %p109 = pneg %p103
      %p110 = scmp.eq.s32.totalorder %s21, 3
      %p111 = por %p109, %p110
      %p112 = scmp.ne.s32.totalorder %s104, %s107
      %p113 = scmp.eq.s32.totalorder %s21, 0
      %p114 = por %p112, %p113
      %p115 = scmp.ne.s32.totalorder %s104, %s107
      %p116 = scmp.eq.s32.totalorder %s26, 3
      %p117 = por %p115, %p116
      %p118 = scmp.ne.s32.totalorder %s107, %s108
      %p119 = scmp.eq.s32.totalorder %s26, 0
      %p120 = por %p118, %p119
      %p121 = scmp.ne.s32.totalorder %s107, %s108
      %p122 = scmp.eq.s32.totalorder %s27, 3
      %p123 = por %p121, %p122
      %p125 = scmp.ne.s32.totalorder %s108, %s124
      %p126 = scmp.eq.s32.totalorder %s27, 0
      %p127 = por %p125, %p126
      %s128 = ssub.s32 %s28, %s47
      %s129 = ssub.s32 %s30, %s39
      %s130 = sor.u32 %s128, %s129
      %s131 = ssub.s32 %s29, %s43
      %s132 = sor.u32 %s130, %s131
      %p133 = scmp.eq.s32.totalorder %s132, 0
      %s135 = sadd.s32 %s134, 1
      %s136 = scalar_select %p133, %s134, %s135
      %p139 = pneg %p133
      %p140 = scmp.eq.s32.totalorder %s21, 3
      %p141 = por %p139, %p140
      %p142 = scmp.ne.s32.totalorder %s134, %s137
      %p143 = scmp.eq.s32.totalorder %s21, 0
      %p144 = por %p142, %p143
      %p145 = scmp.ne.s32.totalorder %s134, %s137
      %p146 = scmp.eq.s32.totalorder %s26, 3
      %p147 = por %p145, %p146
      %p148 = scmp.ne.s32.totalorder %s137, %s138
      %p149 = scmp.eq.s32.totalorder %s26, 0
      %p150 = por %p148, %p149
      %p151 = scmp.ne.s32.totalorder %s137, %s138
      %p152 = scmp.eq.s32.totalorder %s27, 3
      %p153 = por %p151, %p152
      %p155 = scmp.ne.s32.totalorder %s138, %s154
      %p156 = scmp.eq.s32.totalorder %s27, 0
      %p157 = por %p155, %p156
      %p158 = scmp.le.s32.totalorder 1, %s21
      %p159 = scmp.lt.s32.totalorder %s21, 5
      %p160 = pnand %p158, %p159
      %p161 = pneg %p160
      // Predicated region
      $region9: #{tpu_custom_call.1} parent=5 // pred_check
        _
      $region10: #{tpu_custom_call.1} parent=5 // pred_check_branch
        %163 = sbr.rel (%p160) target = $region12
      $region11: #{tpu_custom_call.1} parent=5 // pred_region
        %s164 = ssub.s32 %s21, 1
        // Predicated region
        $region13: #{tpu_custom_call.1} parent=11 // pred_check
          %p165 = pneg %p94
        $region14: #{tpu_custom_call.1} parent=11 // pred_check_branch
          %167 = sbr.rel (%p165) target = $region16
        $region15: #{tpu_custom_call.1} parent=11 // pred_region
          %p168 = scmp.lt.s32.totalorder %s32, 0
          %s169 = scalar_select %p168, %s32, 0
          %s170 = smul.addr %s169, 8
          %s171 = scalar_lea.vmem %s2, %s170
        $region16: #{tpu_custom_call.1} parent=11 // pred_fallthru
          _
        // Predicated region
        $region17: #{tpu_custom_call.1} parent=11 // pred_check
          %p172 = pneg %p120
        $region18: #{tpu_custom_call.1} parent=11 // pred_check_branch
          %174 = sbr.rel (%p172) target = $region20
        $region19: #{tpu_custom_call.1} parent=11 // pred_region
          %p175 = scmp.lt.s32.totalorder %s32, 0
          %s176 = scalar_select %p175, %s32, 0
          %s177 = smul.addr %s176, 8
          %s178 = scalar_lea.vmem %s3, %s177
        $region20: #{tpu_custom_call.1} parent=11 // pred_fallthru
          _
      $region12: #{tpu_custom_call.1} parent=5 // pred_fallthru
        _
      %p179 = scmp.lt.s32.totalorder %s21, 4
      // Predicated region
      $region21: #{tpu_custom_call.1} parent=5 // pred_check
        %p180 = pneg %p179
      $region22: #{tpu_custom_call.1} parent=5 // pred_check_branch
        %182 = sbr.rel (%p180) target = $region24
      $region23: #{tpu_custom_call.1} parent=5 // pred_region
        // Predicated region
        $region25: #{tpu_custom_call.1} parent=23 // pred_check
          %p183 = pneg %p62
        $region26: #{tpu_custom_call.1} parent=23 // pred_check_branch
          %185 = sbr.rel (%p183) target = $region28
        $region27: #{tpu_custom_call.1} parent=23 // pred_region
          %p186 = scmp.lt.s32.totalorder %s28, 1
          %s187 = scalar_select %p186, %s28, 1
          %p188 = scmp.lt.s32.totalorder %s29, 0
          %s189 = scalar_select %p188, %s29, 0
          %s190 = sadd.s32 %s189, %s187
          %s191 = smul.addr %s190, 8
          %s192 = scalar_lea.vmem %s1, %s191
        $region28: #{tpu_custom_call.1} parent=23 // pred_fallthru
          _
      $region24: #{tpu_custom_call.1} parent=5 // pred_fallthru
        _
      %p193 = scmp.le.s32.totalorder 1, %s21
      %p194 = scmp.lt.s32.totalorder %s21, 5
      %p195 = pnand %p193, %p194
      %p196 = pneg %p195
      // Predicated region
      $region29: #{tpu_custom_call.1} parent=5 // pred_check
        _
      $region30: #{tpu_custom_call.1} parent=5 // pred_check_branch
        %198 = sbr.rel (%p195) target = $region32
      $region31: #{tpu_custom_call.1} parent=5 // pred_region
        %s199 = ssub.s32 %s21, 1
        %p200 = scmp.lt.s32.totalorder %s31, 1
        %s201 = scalar_select %p200, %s31, 1
        %p202 = scmp.lt.s32.totalorder %s32, 0
        %s203 = scalar_select %p202, %s32, 0
        %s204 = sadd.s32 %s203, %s201
        %s205 = smul.addr %s204, 8
        %s206 = scalar_lea.vmem %s1, %s205
        %p207 = pneg %p68
        %p208 = pneg %p65
        %p209 = scmp.lt.s32.totalorder %s32, 0
        %s210 = scalar_select %p209, %s32, 0
        %s211 = smul.addr %s210, 8
        %s212 = scalar_lea.vmem %s2, %s211
        %p213 = pneg %p94
        %p214 = pneg %p91
        %p215 = scmp.lt.s32.totalorder %s32, 0
        %s216 = scalar_select %p215, %s32, 0
        %s217 = smul.addr %s216, 8
        %s218 = scalar_lea.vmem %s3, %s217
        %p219 = pneg %p120
        %p220 = pneg %p117
        %p221 = pneg %p150
        %p222 = pneg %p147
        %s223 = sand.u32 %s137, 1
        %s224 = scalar_lea.sflag [#allocation5], %s223
        %s225 = sand.u32 %s137, 1
        %s226 = smul.addr %s225, 8
        %s227 = scalar_lea.vmem [#allocation4], %s226
        %p228 = scmp.lt.s32.totalorder %s31, 1
        %s229 = scalar_select %p228, %s31, 1
        %p230 = scmp.lt.s32.totalorder %s32, 0
        %s231 = scalar_select %p230, %s32, 0
        %s232 = sadd.s32 %s231, %s229
        %s233 = smul.addr %s232, 8
        %s234 = scalar_lea.vmem %s1, %s233
        %p235 = scmp.lt.s32.totalorder %s32, 0
        %s236 = scalar_select %p235, %s32, 0
        %s237 = smul.addr %s236, 8
        %s238 = scalar_lea.vmem %s2, %s237
        %p239 = scmp.lt.s32.totalorder %s32, 0
        %s240 = scalar_select %p239, %s32, 0
        %s241 = smul.addr %s240, 8
        %s242 = scalar_lea.vmem %s3, %s241
        %s243 = smul.u32 %s31, 2
        %s244 = sadd.s32 %s243, %s33
        %s245 = smul.u32 %s244, 13
        %v246 = vld [vmem:[%s234] sm:$0xff]
        %v247 = vld [vmem:[%s238] sm:$0xff]
        %v248 = vld [vmem:[%s242] sm:$0xff]
        %s249 = sld [smem:[#allocation3 + %s245]]
        %s250 = ssub.f32 1.0, %s249
        %v251 = vsub.f32 1.0, %v246
        %v252 = vstv %s249
        %v253 = vmul.f32 %v252, %v246
        %s254 = sadd.s32 %s245, 1
        %s255 = sld [smem:[#allocation3 + %s254]]
        %s256 = smul.f32 %s250, %s255
        %s257 = sadd.s32 %s245, 4
        %s258 = sld [smem:[#allocation3 + %s257]]
        %s259 = sadd.s32 %s245, 7
        %s260 = sld [smem:[#allocation3 + %s259]]
        %s261 = sadd.s32 %s245, 10
        %s262 = sld [smem:[#allocation3 + %s261]]
        %v263 = vstv %s258
        %vm264 = vcmp.ge.f32.partialorder %v246, %v263
        %v265 = vsel %vm264, %v251, %v246
        %v266 = vstv %s260
        %v267 = vmul.f32 %v265, %v266
        %v268 = vfloor.f32 %v267
        %v269 = vstv %s262
        %v270 = vmul.f32 %v268, %v269
        %v271 = vstv %s256
        %v272 = vmul.f32 %v271, %v270
        %v273 = vadd.f32 %v253, %v272
        %s274 = sadd.f32 %s249, %s256
        %s275 = sadd.s32 %s245, 2
        %s276 = sld [smem:[#allocation3 + %s275]]
        %s277 = smul.f32 %s250, %s276
        %s278 = sadd.s32 %s245, 5
        %s279 = sld [smem:[#allocation3 + %s278]]
        %s280 = sadd.s32 %s245, 8
        %s281 = sld [smem:[#allocation3 + %s280]]
        %s282 = sadd.s32 %s245, 11
        %s283 = sld [smem:[#allocation3 + %s282]]
        %v284 = vstv %s279
        %vm285 = vcmp.ge.f32.partialorder %v246, %v284
        %v286 = vsel %vm285, %v251, %v246
        %v287 = vstv %s281
        %v288 = vmul.f32 %v286, %v287
        %v289 = vfloor.f32 %v288
        %v290 = vstv %s283
        %v291 = vmul.f32 %v289, %v290
        %v292 = vstv %s277
        %v293 = vmul.f32 %v292, %v291
        %v294 = vadd.f32 %v273, %v293
        %s295 = sadd.f32 %s274, %s277
        %s296 = sadd.s32 %s245, 3
        %s297 = sld [smem:[#allocation3 + %s296]]
        %s298 = smul.f32 %s250, %s297
        %s299 = sadd.s32 %s245, 6
        %s300 = sld [smem:[#allocation3 + %s299]]
        %s301 = sadd.s32 %s245, 9
        %s302 = sld [smem:[#allocation3 + %s301]]
        %s303 = sadd.s32 %s245, 12
        %s304 = sld [smem:[#allocation3 + %s303]]
        %v305 = vstv %s300
        %vm306 = vcmp.ge.f32.partialorder %v246, %v305
        %v307 = vsel %vm306, %v251, %v246
        %v308 = vstv %s302
        %v309 = vmul.f32 %v307, %v308
        %v310 = vfloor.f32 %v309
        %v311 = vstv %s304
        %v312 = vmul.f32 %v310, %v311
        %v313 = vstv %s298
        %v314 = vmul.f32 %v313, %v312
        %v315 = vadd.f32 %v294, %v314
        %s316 = sadd.f32 %s295, %s298
        %v317 = vstv %s316
        %v318 = vmul.f32 %v317, %v247
        %320 = vset.pattern.permute.xlu0 0
        %321 = vperm.xlu0 %320, %v318
        %v322 = vpop.permute.xlu0 %321
        %v324 = vsub.f32 %v315, %v322
        %326 = vset.pattern.permute.xlu0 0
        %327 = vperm.xlu0 %326, %v248
        %v328 = vpop.permute.xlu0 %327
        %v330 = vmul.f32 %v324, %v328
        %331 = vst [vmem:[%s227] sm:$0xff] %v330
        %s332 = sand.u32 %s137, 1
        %s333 = scalar_lea.sflag [#allocation5], %s332
        %s334 = sand.u32 %s137, 1
        %s335 = smul.addr %s334, 8
        %s336 = scalar_lea.vmem [#allocation4], %s335
        // Predicated region
        $region33: #{tpu_custom_call.1} parent=31 // pred_check
          %p337 = pneg %p147
        $region34: #{tpu_custom_call.1} parent=31 // pred_check_branch
          %339 = sbr.rel (%p337) target = $region36
        $region35: #{tpu_custom_call.1} parent=31 // pred_region
          %341 = vsyncadd %s333, 0
          %s342 = sadd.s32 %s32, %s33
          %s343 = smul.addr %s31, 2
          %s344 = sadd.s32 %s342, %s343
          %s345 = smul.addr %s344, 8
          %s346 = scalar_lea.hbm %s4, %s345
          %s348 = sshll.u32 %s336, 4
          %s349 = int_to_ptr.vmem [resolvable:$true] %s348
          %s350 = sshll.u32 %s346, 4
          %s351 = int_to_ptr.hbm [resolvable:$true] %s350
          %353 = dma.vmem_to_hbm [thread:$0]  %s349, 128, %s351, %s333
        $region36: #{tpu_custom_call.1} parent=31 // pred_fallthru
          _
      $region32: #{tpu_custom_call.1} parent=5 // pred_fallthru
        _
      %p354 = scmp.le.s32.totalorder 2, %s21
      // Predicated region
      $region37: #{tpu_custom_call.1} parent=5 // pred_check
        %p355 = pneg %p354
      $region38: #{tpu_custom_call.1} parent=5 // pred_check_branch
        %357 = sbr.rel (%p355) target = $region40
      $region39: #{tpu_custom_call.1} parent=5 // pred_region
        %s358 = ssub.s32 %s21, 2
        // Predicated region
        $region41: #{tpu_custom_call.1} parent=39 // pred_check
          %p359 = pneg %p153
        $region42: #{tpu_custom_call.1} parent=39 // pred_check_branch
          %361 = sbr.rel (%p359) target = $region44
        $region43: #{tpu_custom_call.1} parent=39 // pred_region
          %s362 = sand.u32 %s138, 1
          %s363 = scalar_lea.sflag [#allocation5], %s362
          %s364 = sand.u32 %s138, 1
          %s365 = smul.addr %s364, 8
          %s366 = scalar_lea.vmem [#allocation4], %s365
          %368 = dma.done %s363, 128
        $region44: #{tpu_custom_call.1} parent=39 // pred_fallthru
          _
      $region40: #{tpu_custom_call.1} parent=5 // pred_fallthru
        _
    $region6: #{tpu_custom_call.1} parent=1 // loop_footer
      %s25 = sadd.s32 1, %s21
    $region7: #{tpu_custom_call.1} parent=1 // loop_footer_branch
      %20 = sbr.rel target = $region3
    $region8: #{tpu_custom_call.1} parent=1 // loop_exit
      _
    %369 = vsyncpa [#allocation5], 1
    %s370 = scalar_lea.sflag [#allocation5], 1
    %371 = vsyncpa %s370, 1

</llo_original>
